<compile_context>
chip_gen: v5e
topology: v5e:2x2
jax: 0.10.0
libtpu: 0.0.40
codegen_flags: <defaults>
</compile_context>

<pallas_src>
import functools

import jax
import jax.numpy as jnp
import numpy as np
from jax.experimental import pallas as pl
from jax.experimental.pallas import tpu as pltpu


def _ln4dcf_kernel(x_ref, g_ref, b_ref, o_ref, *, eps, inv_n):
    # x_ref/o_ref: (bB, C, tT, Q)   g_ref/b_ref: (1, C, 1, Q)
    x = x_ref[...].astype(jnp.float32)

    # Pass 1: mean over (C, Q) per (b, t): lane reduce (axis 3), then the small
    # cross-channel sum (axis 1).
    s1 = jnp.sum(jnp.sum(x, axis=3, keepdims=True), axis=1, keepdims=True)
    mu = s1 * inv_n                                         # (bB, 1, tT, 1)

    # Pass 2: biased variance from centered values (no E[x^2]-mu^2
    # cancellation); the block is resident in VMEM so no extra HBM traffic.
    d = x - mu
    s2 = jnp.sum(jnp.sum(d * d, axis=3, keepdims=True), axis=1, keepdims=True)
    inv_std = jax.lax.rsqrt(s2 * inv_n + eps)               # EUP slot

    gamma = g_ref[...].astype(jnp.float32)                  # resident across steps
    beta = b_ref[...].astype(jnp.float32)
    # TODO(synk): on v6e/v7x a bf16 elementwise tail would halve VALU work for
    # bf16 inputs; kept f32 here since the module specifies f32 params.
    o_ref[...] = (d * inv_std * gamma + beta).astype(o_ref.dtype)


def _ceil_to(v, m):
    return -(-v // m) * m


def _divisors_desc(n):
    return [d for d in range(n, 0, -1) if n % d == 0]


def _padded_block_bytes(bb, C, tt, Q, itemsize):
    # VMEM footprint of one (bb, C, tt, Q) block: the last two dims are tiled
    # to (8, 128), so tt rounds up to 8 sublanes and Q to 128 lanes.
    return bb * C * _ceil_to(max(tt, 1), 8) * _ceil_to(Q, 128) * itemsize


def _vmem_capacity_bytes():
    try:
        cap = int(getattr(pltpu.get_tpu_info(), "vmem_capacity_bytes"))
        if cap > 0:
            return cap
    except Exception:
        pass
    return 64 << 20  # conservative fallback: v7x per-TensorCore VMEM


def _choose_tiles(B, C, T, Q, itemsize, block_cap):
    """Pick (bB, tT, T_pad) so one padded block stays under block_cap."""
    # T-tile candidates: divisors of T that are multiples of 8, plus T itself
    # (a full-extent block is always legal even if T % 8 != 0).
    t_cands = [t for t in _divisors_desc(T) if t % 8 == 0 or t == T]
    tT, T_pad = None, T
    for t in t_cands:
        if _padded_block_bytes(1, C, t, Q, itemsize) <= block_cap:
            tT = t
            break
    if tT is None:
        # No divisor of T fits: zero-pad T (sliced off afterwards) and use the
        # largest multiple-of-8 tile that fits (at least 8 rows).
        base = _padded_block_bytes(1, C, 8, Q, itemsize)
        tT = 8 * max(1, block_cap // base) if base <= block_cap else 8
        tT = min(tT, _ceil_to(T, 8))
        T_pad = _ceil_to(T, tT)

    # Batch tiling: fold as many batches as fit into one block.
    bB = 1
    for b in _divisors_desc(B):
        if _padded_block_bytes(b, C, tT, Q, itemsize) <= block_cap:
            bB = b
            break

    # Prefer >= 2 grid steps so v7x's two TensorCores can split the work.
    if (B // bB) * (T_pad // tT) < 2:
        if B > 1:
            bB = next(b for b in _divisors_desc(B) if B // b >= 2)
        elif T_pad == T:
            smaller = [t for t in t_cands if t < tT]
            if smaller:
                tT = smaller[0]
    return bB, tT, T_pad


def layer_normalization_4dcf(x, gamma, beta, eps=1e-5):
    """x: (B, C, T, Q) NCHW (as in PyTorch).  gamma/beta: (1, C, 1, Q)."""
    B, C, T, Q = x.shape
    itemsize = x.dtype.itemsize

    phys_vmem = _vmem_capacity_bytes()
    # Scoped budget: half of physical VMEM (v5e/v6e: 128 MiB phys, v7x: 64),
    # capped; one block may use ~1/6 of it (2x in + 2x out double buffering,
    # intermediates, params, compiler scratch).
    budget = min(phys_vmem // 2, 48 << 20)
    block_cap = max(budget // 6, 1 << 20)

    bB, tT, T_pad = _choose_tiles(B, C, T, Q, itemsize, block_cap)

    x_in = x if T_pad == T else jnp.pad(x, ((0, 0), (0, 0), (0, T_pad - T), (0, 0)))
    grid = (B // bB, T_pad // tT)

    blk = _padded_block_bytes(bB, C, tT, Q, itemsize)
    params = 4 * C * _ceil_to(Q, 128) * 4  # gamma+beta, 2 buffers each, f32
    vmem_limit = int(min(max(6 * blk + params + (8 << 20), 16 << 20),
                         (phys_vmem * 3) // 4))

    kernel = functools.partial(_ln4dcf_kernel, eps=float(eps), inv_n=1.0 / (C * Q))

    out = pl.pallas_call(
        kernel,
        out_shape=jax.ShapeDtypeStruct((B, C, T_pad, Q), x.dtype),
        grid_spec=pltpu.PrefetchScalarGridSpec(
            num_scalar_prefetch=0,
            grid=grid,
            in_specs=[
                pl.BlockSpec((bB, C, tT, Q), lambda i, j: (i, 0, j, 0)),
                pl.BlockSpec((1, C, 1, Q), lambda i, j: (0, 0, 0, 0)),
                pl.BlockSpec((1, C, 1, Q), lambda i, j: (0, 0, 0, 0)),
            ],
            out_specs=pl.BlockSpec((bB, C, tT, Q), lambda i, j: (i, 0, j, 0)),
        ),
        compiler_params=pltpu.CompilerParams(
            dimension_semantics=("parallel", "parallel"),
            vmem_limit_bytes=vmem_limit),
    )(x_in, gamma, beta)

    return out if T_pad == T else out[:, :, :T, :]


def _reference(x, gamma, beta, eps=1e-5):
    mu = jnp.mean(x, axis=(1, 3), keepdims=True)
    var = jnp.mean((x - mu) ** 2, axis=(1, 3), keepdims=True)
    return (x - mu) / jnp.sqrt(var + eps) * gamma + beta


if __name__ == "__main__":
    key = jax.random.PRNGKey(0)

    # Primary case: input_dimension = (C, Q) = (4, 16); x: (B, C, T, Q).
    B, C, T, Q = 2, 4, 16, 16
    kx, kg, kb, kx2 = jax.random.split(key, 4)
    x = jax.random.normal(kx, (B, C, T, Q), dtype=jnp.float32)
    # Module init is ones_/zeros_, but use non-trivial deterministic values to
    # actually exercise the gamma/beta broadcast path.
    gamma = 1.0 + 0.1 * jax.random.normal(kg, (1, C, 1, Q), dtype=jnp.float32)
    beta = 0.1 * jax.random.normal(kb, (1, C, 1, Q), dtype=jnp.float32)

    out = jax.block_until_ready(layer_normalization_4dcf(x, gamma, beta, eps=1e-5))
    ref = jax.block_until_ready(_reference(x, gamma, beta, eps=1e-5))
    np.testing.assert_allclose(np.asarray(out), np.asarray(ref), rtol=1e-5, atol=1e-5)

    # Second case: exercises batch tiling (bB > 1) and a non-zero mean
    # (validates the two-pass variance path).
    B2, T2 = 4, 24
    x2 = 3.0 + jax.random.normal(kx2, (B2, C, T2, Q), dtype=jnp.float32)
    out2 = jax.block_until_ready(layer_normalization_4dcf(x2, gamma, beta, eps=1e-5))
    ref2 = jax.block_until_ready(_reference(x2, gamma, beta, eps=1e-5))
    np.testing.assert_allclose(np.asarray(out2), np.asarray(ref2), rtol=1e-5, atol=1e-5)

    print("KERNEL_OK")
</pallas_src>

<mosaic_0001>
module attributes {stable_mosaic.version = 11 : i64} {
  func.func @_ln4dcf_kernel(%arg0: i32, %arg1: i32, %arg2: memref<1x4x16x16xf32, #tpu.memory_space<vmem>>, %arg3: memref<1x4x1x16xf32, #tpu.memory_space<vmem>>, %arg4: memref<1x4x1x16xf32, #tpu.memory_space<vmem>>, %arg5: memref<1x4x16x16xf32, #tpu.memory_space<vmem>>) attributes {dimension_semantics = [#tpu.dimension_semantics<parallel>, #tpu.dimension_semantics<parallel>], iteration_bounds = array<i64: 2, 1>, scalar_prefetch = 0 : i64, scratch_operands = 0 : i64, tpu.core_type = #tpu.core_type<tc>, window_params = [{transform_indices = @transform_0, window_bounds = array<i64: 1, 4, 16, 16>}, {pipeline_mode = #tpu.pipeline_mode<synchronous>, transform_indices = @transform_1, window_bounds = array<i64: 1, 4, 1, 16>}, {pipeline_mode = #tpu.pipeline_mode<synchronous>, transform_indices = @transform_2, window_bounds = array<i64: 1, 4, 1, 16>}, {transform_indices = @transform_3, window_bounds = array<i64: 1, 4, 16, 16>}]} {
    %c0 = arith.constant 0 : index
    %c0_0 = arith.constant 0 : index
    %c0_1 = arith.constant 0 : index
    %c0_2 = arith.constant 0 : index
    %0 = vector.load %arg2[%c0, %c0_0, %c0_1, %c0_2] : memref<1x4x16x16xf32, #tpu.memory_space<vmem>>, vector<1x4x16x16xf32>
    %cst = arith.constant dense<0.000000e+00> : vector<1x4x16xf32>
    %1 = vector.multi_reduction <add>, %0, %cst [3] : vector<1x4x16x16xf32> to vector<1x4x16xf32>
    %2 = vector.shape_cast %1 : vector<1x4x16xf32> to vector<1x4x16x1xf32>
    %cst_3 = arith.constant dense<0.000000e+00> : vector<1x16x1xf32>
    %3 = vector.multi_reduction <add>, %2, %cst_3 [1] : vector<1x4x16x1xf32> to vector<1x16x1xf32>
    %4 = vector.shape_cast %3 : vector<1x16x1xf32> to vector<1x1x16x1xf32>
    %cst_4 = arith.constant 1.562500e-02 : f32
    %5 = vector.broadcast %cst_4 : f32 to vector<1x1x16x1xf32>
    %6 = arith.mulf %4, %5 : vector<1x1x16x1xf32>
    %7 = vector.broadcast %6 : vector<1x1x16x1xf32> to vector<1x4x16x16xf32>
    %8 = arith.subf %0, %7 : vector<1x4x16x16xf32>
    %9 = arith.mulf %8, %8 : vector<1x4x16x16xf32>
    %cst_5 = arith.constant dense<0.000000e+00> : vector<1x4x16xf32>
    %10 = vector.multi_reduction <add>, %9, %cst_5 [3] : vector<1x4x16x16xf32> to vector<1x4x16xf32>
    %11 = vector.shape_cast %10 : vector<1x4x16xf32> to vector<1x4x16x1xf32>
    %cst_6 = arith.constant dense<0.000000e+00> : vector<1x16x1xf32>
    %12 = vector.multi_reduction <add>, %11, %cst_6 [1] : vector<1x4x16x1xf32> to vector<1x16x1xf32>
    %13 = vector.shape_cast %12 : vector<1x16x1xf32> to vector<1x1x16x1xf32>
    %cst_7 = arith.constant 1.562500e-02 : f32
    %14 = vector.broadcast %cst_7 : f32 to vector<1x1x16x1xf32>
    %15 = arith.mulf %13, %14 : vector<1x1x16x1xf32>
    %cst_8 = arith.constant 9.99999974E-6 : f32
    %16 = vector.broadcast %cst_8 : f32 to vector<1x1x16x1xf32>
    %17 = arith.addf %15, %16 : vector<1x1x16x1xf32>
    %18 = math.rsqrt %17 : vector<1x1x16x1xf32>
    %c0_9 = arith.constant 0 : index
    %c0_10 = arith.constant 0 : index
    %c0_11 = arith.constant 0 : index
    %c0_12 = arith.constant 0 : index
    %19 = vector.load %arg3[%c0_9, %c0_10, %c0_11, %c0_12] : memref<1x4x1x16xf32, #tpu.memory_space<vmem>>, vector<1x4x1x16xf32>
    %c0_13 = arith.constant 0 : index
    %c0_14 = arith.constant 0 : index
    %c0_15 = arith.constant 0 : index
    %c0_16 = arith.constant 0 : index
    %20 = vector.load %arg4[%c0_13, %c0_14, %c0_15, %c0_16] : memref<1x4x1x16xf32, #tpu.memory_space<vmem>>, vector<1x4x1x16xf32>
    %21 = vector.broadcast %18 : vector<1x1x16x1xf32> to vector<1x4x16x16xf32>
    %22 = arith.mulf %8, %21 : vector<1x4x16x16xf32>
    %23 = vector.broadcast %19 : vector<1x4x1x16xf32> to vector<1x4x16x16xf32>
    %24 = arith.mulf %22, %23 : vector<1x4x16x16xf32>
    %25 = vector.broadcast %20 : vector<1x4x1x16xf32> to vector<1x4x16x16xf32>
    %26 = arith.addf %24, %25 : vector<1x4x16x16xf32>
    %c0_17 = arith.constant 0 : index
    %c0_18 = arith.constant 0 : index
    %c0_19 = arith.constant 0 : index
    %c0_20 = arith.constant 0 : index
    %27 = vector.load %arg5[%c0_17, %c0_18, %c0_19, %c0_20] : memref<1x4x16x16xf32, #tpu.memory_space<vmem>>, vector<1x4x16x16xf32>
    tpu.vector_store %arg5[%c0_17, %c0_18, %c0_19, %c0_20], %26 {strides = array<i32>} : memref<1x4x16x16xf32, #tpu.memory_space<vmem>>, vector<1x4x16x16xf32>,
    return
  }
  func.func @transform_0(%arg0: i32, %arg1: i32) -> (i32, i32, i32, i32) {
    %c0_i32 = arith.constant 0 : i32
    %c0_i32_0 = arith.constant 0 : i32
    %c0_i32_1 = arith.constant 0 : i32
    return %arg0, %c0_i32, %arg1, %c0_i32_0 : i32, i32, i32, i32
  }
  func.func @transform_1(%arg0: i32, %arg1: i32) -> (i32, i32, i32, i32) {
    %c0_i32 = arith.constant 0 : i32
    %c0_i32_0 = arith.constant 0 : i32
    %c0_i32_1 = arith.constant 0 : i32
    %c0_i32_2 = arith.constant 0 : i32
    %c0_i32_3 = arith.constant 0 : i32
    return %c0_i32, %c0_i32_0, %c0_i32_1, %c0_i32_2 : i32, i32, i32, i32
  }
  func.func @transform_2(%arg0: i32, %arg1: i32) -> (i32, i32, i32, i32) {
    %c0_i32 = arith.constant 0 : i32
    %c0_i32_0 = arith.constant 0 : i32
    %c0_i32_1 = arith.constant 0 : i32
    %c0_i32_2 = arith.constant 0 : i32
    %c0_i32_3 = arith.constant 0 : i32
    return %c0_i32, %c0_i32_0, %c0_i32_1, %c0_i32_2 : i32, i32, i32, i32
  }
  func.func @transform_3(%arg0: i32, %arg1: i32) -> (i32, i32, i32, i32) {
    %c0_i32 = arith.constant 0 : i32
    %c0_i32_0 = arith.constant 0 : i32
    %c0_i32_1 = arith.constant 0 : i32
    return %arg0, %c0_i32, %arg1, %c0_i32_0 : i32, i32, i32, i32
  }
}

</mosaic_0001>

<llo_original>
// kernel: tpu_custom_call.1
$region0: #{tpu_custom_call.1}
  #allocation0 [shape = 'u32[]', space=smem, size = 0x4, offset = 0x4, fixed_abs, tag = 'smem constant byte address 0x4 - core index']
  #allocation1 [shape = 'u32[72,128]{1,0:T(1,128)}', space=vmem, size = 0x9000, scoped, tag = 'internal scratch']
  %s0 = inlined_call_operand.hbm [shape: f32[2,4,16,16], index: 0, kind: input, shape index: {}]
  %s1 = inlined_call_operand.hbm [shape: f32[1,4,1,16], index: 1, kind: input, shape index: {}]
  %s2 = inlined_call_operand.hbm [shape: f32[1,4,1,16], index: 2, kind: input, shape index: {}]
  %s3 = inlined_call_operand.hbm [shape: f32[2,4,16,16], index: 3, kind: output, shape index: {}]
  %s4 = sld [smem:[#allocation0]]
  $region57: #{tpu_custom_call.1} parent=0
    _
  %s6 = ssub.s32 1, %s4
  %s7 = scalar_select 0, %s6, %s4
  $region1: #{tpu_custom_call.1} parent=0
    #allocation2 [shape = 'u8[65536]{0}', space=vmem, size = 0x10000, scoped, tag = 'input window, operand 0']
    #allocation3 [shape = 's32[2]{0}', space=sflag, size = 0x8, scoped, tag = 'scoped memory for tpu_custom_call.1']
    #allocation4 [shape = 's32[2]{0}', space=sflag, size = 0x8, scoped, tag = 'scoped memory for tpu_custom_call.1']
    #allocation5 [shape = 'u8[2048]{0}', space=vmem, size = 0x800, scoped, tag = 'input window, operand 1, single buffered']
    #allocation6 [shape = 's32[1]{0}', space=sflag, size = 0x4, scoped, tag = 'scoped memory for tpu_custom_call.1']
    #allocation7 [shape = 'u8[2048]{0}', space=vmem, size = 0x800, scoped, tag = 'input window, operand 2, single buffered']
    #allocation8 [shape = 'u8[65536]{0}', space=vmem, size = 0x10000, scoped, tag = 'output window, operand 0']
    %8 = vsyncpa [#allocation3], 0
    %s9 = scalar_lea.sflag [#allocation3], 1
    %10 = vsyncpa %s9, 0
    %11 = vsyncpa [#allocation6], 0
    %12 = vsyncpa [#allocation4], 0
    %s13 = scalar_lea.sflag [#allocation4], 1
    %14 = vsyncpa %s13, 0
    loop: start=0, step=1, limit=4
    $region2: #{tpu_custom_call.1} parent=1 // loop_pre_header
      _
    $region3: #{tpu_custom_call.1} parent=1 // loop_header
      %s16 = sphi 0, %s20
      %p17 = scmp.ge.s32.totalorder %s16, 4
      %s23 = sphi 0, %s35
      %s24 = sphi 0, %s31
      %s25 = sphi 0, %s23
      %s26 = sphi 0, %s24
      %s27 = sphi 0, %s25
      %s28 = sphi 0, %s26
      %s40 = sphi 0, %s42
      %s43 = sphi 0, %s40
      %s44 = sphi 0, %s43
      %s60 = sphi 0, %s44
      %s64 = sphi 0, %s64
      %s66 = sphi 0, %s64
      %s67 = sphi 0, %s66
      %s81 = sphi 0, %s67
      %s85 = sphi 0, %s85
      %s87 = sphi 0, %s85
      %s88 = sphi 0, %s87
      %s102 = sphi 0, %s88
      %s110 = sphi 0, %s112
      %s113 = sphi 0, %s110
      %s114 = sphi 0, %s113
      %s130 = sphi 0, %s114
    $region4: #{tpu_custom_call.1} parent=1 // loop_header_branch
      %19 = sbr.rel (%p17) target = $region8
    $region5: #{tpu_custom_call.1} parent=1 // loop_body
      %s21 = ssub.s32 %s16, 1
      %s22 = ssub.s32 %s16, 2
      %s29 = sadd.s32 1, %s24
      %p30 = scmp.ge.s32.totalorder %s29, 1
      %s31 = scalar_select %p30, 0, %s29
      %s32 = sadd.s32 1, %s23
      %s33 = scalar_select %p30, %s32, %s23
      %p34 = scmp.ge.s32.totalorder %s33, 2
      %s35 = scalar_select %p34, 0, %s33
      %s36 = ssub.s32 %s23, %s35
      %s37 = ssub.s32 %s24, %s31
      %s38 = sor.u32 %s36, %s37
      %p39 = scmp.eq.s32.totalorder %s38, 0
      %s41 = sadd.s32 %s40, 1
      %s42 = scalar_select %p39, %s40, %s41
      %p45 = pneg %p39
      %p46 = scmp.eq.s32.totalorder %s16, 1
      %p47 = por %p45, %p46
      %p48 = scmp.ne.s32.totalorder %s40, %s43
      %p49 = scmp.eq.s32.totalorder %s16, 0
      %p50 = por %p48, %p49
      %p51 = scmp.ne.s32.totalorder %s40, %s43
      %p52 = scmp.eq.s32.totalorder %s21, 1
      %p53 = por %p51, %p52
      %p54 = scmp.ne.s32.totalorder %s43, %s44
      %p55 = scmp.eq.s32.totalorder %s21, 0
      %p56 = por %p54, %p55
      %p57 = scmp.ne.s32.totalorder %s43, %s44
      %p58 = scmp.eq.s32.totalorder %s22, 1
      %p59 = por %p57, %p58
      %p61 = scmp.ne.s32.totalorder %s44, %s60
      %p62 = scmp.eq.s32.totalorder %s22, 0
      %p63 = por %p61, %p62
      %s65 = sadd.s32 %s64, 1
      %p68 = scmp.eq.s32.totalorder %s16, 1
      %p69 = scmp.ne.s32.totalorder %s64, %s66
      %p70 = scmp.eq.s32.totalorder %s16, 0
      %p71 = por %p69, %p70
      %p72 = scmp.ne.s32.totalorder %s64, %s66
      %p73 = scmp.eq.s32.totalorder %s21, 1
      %p74 = por %p72, %p73
      %p75 = scmp.ne.s32.totalorder %s66, %s67
      %p76 = scmp.eq.s32.totalorder %s21, 0
      %p77 = por %p75, %p76
      %p78 = scmp.ne.s32.totalorder %s66, %s67
      %p79 = scmp.eq.s32.totalorder %s22, 1
      %p80 = por %p78, %p79
      %p82 = scmp.ne.s32.totalorder %s67, %s81
      %p83 = scmp.eq.s32.totalorder %s22, 0
      %p84 = por %p82, %p83
      %s86 = sadd.s32 %s85, 1
      %p89 = scmp.eq.s32.totalorder %s16, 1
      %p90 = scmp.ne.s32.totalorder %s85, %s87
      %p91 = scmp.eq.s32.totalorder %s16, 0
      %p92 = por %p90, %p91
      %p93 = scmp.ne.s32.totalorder %s85, %s87
      %p94 = scmp.eq.s32.totalorder %s21, 1
      %p95 = por %p93, %p94
      %p96 = scmp.ne.s32.totalorder %s87, %s88
      %p97 = scmp.eq.s32.totalorder %s21, 0
      %p98 = por %p96, %p97
      %p99 = scmp.ne.s32.totalorder %s87, %s88
      %p100 = scmp.eq.s32.totalorder %s22, 1
      %p101 = por %p99, %p100
      %p103 = scmp.ne.s32.totalorder %s88, %s102
      %p104 = scmp.eq.s32.totalorder %s22, 0
      %p105 = por %p103, %p104
      %s106 = ssub.s32 %s23, %s35
      %s107 = ssub.s32 %s24, %s31
      %s108 = sor.u32 %s106, %s107
      %p109 = scmp.eq.s32.totalorder %s108, 0
      %s111 = sadd.s32 %s110, 1
      %s112 = scalar_select %p109, %s110, %s111
      %p115 = pneg %p109
      %p116 = scmp.eq.s32.totalorder %s16, 1
      %p117 = por %p115, %p116
      %p118 = scmp.ne.s32.totalorder %s110, %s113
      %p119 = scmp.eq.s32.totalorder %s16, 0
      %p120 = por %p118, %p119
      %p121 = scmp.ne.s32.totalorder %s110, %s113
      %p122 = scmp.eq.s32.totalorder %s21, 1
      %p123 = por %p121, %p122
      %p124 = scmp.ne.s32.totalorder %s113, %s114
      %p125 = scmp.eq.s32.totalorder %s21, 0
      %p126 = por %p124, %p125
      %p127 = scmp.ne.s32.totalorder %s113, %s114
      %p128 = scmp.eq.s32.totalorder %s22, 1
      %p129 = por %p127, %p128
      %p131 = scmp.ne.s32.totalorder %s114, %s130
      %p132 = scmp.eq.s32.totalorder %s22, 0
      %p133 = por %p131, %p132
      %p134 = scmp.le.s32.totalorder 1, %s16
      %p135 = scmp.lt.s32.totalorder %s16, 3
      %p136 = pnand %p134, %p135
      %p137 = pneg %p136
      // Predicated region
      $region9: #{tpu_custom_call.1} parent=5 // pred_check
        _
      $region10: #{tpu_custom_call.1} parent=5 // pred_check_branch
        %139 = sbr.rel (%p136) target = $region12
      $region11: #{tpu_custom_call.1} parent=5 // pred_region
        %s140 = ssub.s32 %s16, 1
        // Predicated region
        $region13: #{tpu_custom_call.1} parent=11 // pred_check
          %p141 = pneg %p77
        $region14: #{tpu_custom_call.1} parent=11 // pred_check_branch
          %143 = sbr.rel (%p141) target = $region16
        $region15: #{tpu_custom_call.1} parent=11 // pred_region
          %145 = vsyncadd [#allocation6], 0
          %s146 = sshll.u32 %s1, 4
          %s147 = int_to_ptr.hbm [resolvable:$true] %s146
          %s148 = sshll.u32 [#allocation5], 4
          %s149 = int_to_ptr.vmem [resolvable:$true] %s148
          %154 = dma.hbm_to_vmem [thread:$0]  %s147, 64, %s149, [#allocation6], 16, 16, 1
        $region16: #{tpu_custom_call.1} parent=11 // pred_fallthru
          _
        // Predicated region
        $region17: #{tpu_custom_call.1} parent=11 // pred_check
          %p155 = pneg %p98
        $region18: #{tpu_custom_call.1} parent=11 // pred_check_branch
          %157 = sbr.rel (%p155) target = $region20
        $region19: #{tpu_custom_call.1} parent=11 // pred_region
          %159 = vsyncadd [#allocation6], 0
          %s160 = sshll.u32 %s2, 4
          %s161 = int_to_ptr.hbm [resolvable:$true] %s160
          %s162 = sshll.u32 [#allocation7], 4
          %s163 = int_to_ptr.vmem [resolvable:$true] %s162
          %168 = dma.hbm_to_vmem [thread:$0]  %s161, 64, %s163, [#allocation6], 16, 16, 1
        $region20: #{tpu_custom_call.1} parent=11 // pred_fallthru
          _
      $region12: #{tpu_custom_call.1} parent=5 // pred_fallthru
        _
      %p169 = scmp.lt.s32.totalorder %s16, 2
      // Predicated region
      $region21: #{tpu_custom_call.1} parent=5 // pred_check
        %p170 = pneg %p169
      $region22: #{tpu_custom_call.1} parent=5 // pred_check_branch
        %172 = sbr.rel (%p170) target = $region24
      $region23: #{tpu_custom_call.1} parent=5 // pred_region
        // Predicated region
        $region25: #{tpu_custom_call.1} parent=23 // pred_check
          %p173 = pneg %p50
        $region26: #{tpu_custom_call.1} parent=23 // pred_check_branch
          %175 = sbr.rel (%p173) target = $region28
        $region27: #{tpu_custom_call.1} parent=23 // pred_region
          %s176 = sand.u32 %s40, 1
          %s177 = scalar_lea.sflag [#allocation3], %s176
          %s178 = sand.u32 %s40, 1
          %s179 = smul.addr %s178, 64
          %s180 = scalar_lea.vmem [#allocation2], %s179
          %s181 = smul.u32 2, %s24
          %183 = vsyncadd %s177, 0
          %s184 = smul.addr %s23, 8
          %s185 = sadd.s32 %s181, %s184
          %s186 = smul.addr %s185, 8
          %s187 = scalar_lea.hbm %s0, %s186
          %s188 = sshll.u32 %s187, 4
          %s189 = int_to_ptr.hbm [resolvable:$true] %s188
          %s190 = sshll.u32 %s180, 4
          %s191 = int_to_ptr.vmem [resolvable:$true] %s190
          %196 = dma.hbm_to_vmem [thread:$0]  %s189, 1024, %s191, %s177, 128, 128, 8
        $region28: #{tpu_custom_call.1} parent=23 // pred_fallthru
          _
      $region24: #{tpu_custom_call.1} parent=5 // pred_fallthru
        _
      %p197 = scmp.le.s32.totalorder 1, %s16
      %p198 = scmp.lt.s32.totalorder %s16, 3
      %p199 = pnand %p197, %p198
      %p200 = pneg %p199
      // Predicated region
      $region29: #{tpu_custom_call.1} parent=5 // pred_check
        _
      $region30: #{tpu_custom_call.1} parent=5 // pred_check_branch
        %202 = sbr.rel (%p199) target = $region32
      $region31: #{tpu_custom_call.1} parent=5 // pred_region
        %s203 = ssub.s32 %s16, 1
        %s204 = sand.u32 %s43, 1
        %s205 = scalar_lea.sflag [#allocation3], %s204
        %s206 = sand.u32 %s43, 1
        %s207 = smul.addr %s206, 64
        %s208 = scalar_lea.vmem [#allocation2], %s207
        // Predicated region
        $region33: #{tpu_custom_call.1} parent=31 // pred_check
          %p209 = pneg %p56
        $region34: #{tpu_custom_call.1} parent=31 // pred_check_branch
          %211 = sbr.rel (%p209) target = $region36
        $region35: #{tpu_custom_call.1} parent=31 // pred_region
          %213 = dma.done %s205, 1024
        $region36: #{tpu_custom_call.1} parent=31 // pred_fallthru
          _
        // Predicated region
        $region37: #{tpu_custom_call.1} parent=31 // pred_check
          %p214 = pneg %p77
        $region38: #{tpu_custom_call.1} parent=31 // pred_check_branch
          %216 = sbr.rel (%p214) target = $region40
        $region39: #{tpu_custom_call.1} parent=31 // pred_region
          %218 = dma.done [#allocation6], 64
        $region40: #{tpu_custom_call.1} parent=31 // pred_fallthru
          _
        // Predicated region
        $region41: #{tpu_custom_call.1} parent=31 // pred_check
          %p219 = pneg %p98
        $region42: #{tpu_custom_call.1} parent=31 // pred_check_branch
          %221 = sbr.rel (%p219) target = $region44
        $region43: #{tpu_custom_call.1} parent=31 // pred_region
          %223 = dma.done [#allocation6], 64
        $region44: #{tpu_custom_call.1} parent=31 // pred_fallthru
          _
        %s224 = sand.u32 %s43, 1
        %s225 = scalar_lea.sflag [#allocation3], %s224
        %s226 = sand.u32 %s43, 1
        %s227 = smul.addr %s226, 64
        %s228 = scalar_lea.vmem [#allocation2], %s227
        %p229 = pneg %p56
        %p230 = pneg %p53
        %p231 = pneg %p77
        %p232 = pneg %p74
        %p233 = pneg %p98
        %p234 = pneg %p95
        %p235 = pneg %p126
        %p236 = pneg %p123
        %s237 = sand.u32 %s113, 1
        %s238 = scalar_lea.sflag [#allocation4], %s237
        %s239 = sand.u32 %s113, 1
        %s240 = smul.addr %s239, 64
        %s241 = scalar_lea.vmem [#allocation8], %s240
        %s242 = smul.u32 2, %s26
        %s243 = smul.u32 2, %s26
        %v244 = vld [vmem:[%s208] sm:$0xff]
        %v245 = vld [vmem:[%s208 + $0x8] sm:$0xff]
        %v246 = vld [vmem:[%s208 + $0x10] sm:$0xff]
        %v247 = vld [vmem:[%s208 + $0x18] sm:$0xff]
        %v248 = vld [vmem:[%s208 + $0x20] sm:$0xff]
        %v249 = vld [vmem:[%s208 + $0x28] sm:$0xff]
        %v250 = vld [vmem:[%s208 + $0x30] sm:$0xff]
        %v251 = vld [vmem:[%s208 + $0x38] sm:$0xff]
        %vm252 = vcmask 130048
        %v253 = vsel %vm252, %v244, 0.0
        %254 = vadd.xlane.f32.xlu0 %v253
        %v255 = vpop.xlane.xlu0 %254
        %v256 = vsel %vm252, %v245, 0.0
        %257 = vadd.xlane.f32.xlu0 %v256
        %v258 = vpop.xlane.xlu0 %257
        %v259 = vsel %vm252, %v246, 0.0
        %260 = vadd.xlane.f32.xlu0 %v259
        %v261 = vpop.xlane.xlu0 %260
        %v262 = vsel %vm252, %v247, 0.0
        %263 = vadd.xlane.f32.xlu0 %v262
        %v264 = vpop.xlane.xlu0 %263
        %v265 = vsel %vm252, %v248, 0.0
        %266 = vadd.xlane.f32.xlu0 %v265
        %v267 = vpop.xlane.xlu0 %266
        %v268 = vsel %vm252, %v249, 0.0
        %269 = vadd.xlane.f32.xlu0 %v268
        %v270 = vpop.xlane.xlu0 %269
        %v271 = vsel %vm252, %v250, 0.0
        %272 = vadd.xlane.f32.xlu0 %v271
        %v273 = vpop.xlane.xlu0 %272
        %v274 = vsel %vm252, %v251, 0.0
        %275 = vadd.xlane.f32.xlu0 %v274
        %v276 = vpop.xlane.xlu0 %275
        %v277 = vadd.f32 %v255, %v261
        %v278 = vadd.f32 %v277, %v267
        %v279 = vadd.f32 %v278, %v273
        %v280 = vadd.f32 %v258, %v264
        %v281 = vadd.f32 %v280, %v270
        %v282 = vadd.f32 %v281, %v276
        %v283 = vmul.f32 %v279, 0.015625
        %v284 = vmul.f32 %v282, 0.015625
        %v285 = vsub.f32 %v244, %v283
        %v286 = vsub.f32 %v245, %v284
        %v287 = vsub.f32 %v246, %v283
        %v288 = vsub.f32 %v247, %v284
        %v289 = vsub.f32 %v248, %v283
        %v290 = vsub.f32 %v249, %v284
        %v291 = vsub.f32 %v250, %v283
        %v292 = vsub.f32 %v251, %v284
        %v293 = vmul.f32 %v285, %v285
        %v294 = vmul.f32 %v286, %v286
        %v295 = vmul.f32 %v287, %v287
        %v296 = vmul.f32 %v288, %v288
        %v297 = vmul.f32 %v289, %v289
        %v298 = vmul.f32 %v290, %v290
        %v299 = vmul.f32 %v291, %v291
        %v300 = vmul.f32 %v292, %v292
        %v301 = vsel %vm252, %v293, 0.0
        %302 = vadd.xlane.f32.xlu0 %v301
        %v303 = vpop.xlane.xlu0 %302
        %v304 = vsel %vm252, %v294, 0.0
        %305 = vadd.xlane.f32.xlu0 %v304
        %v306 = vpop.xlane.xlu0 %305
        %v307 = vsel %vm252, %v295, 0.0
        %308 = vadd.xlane.f32.xlu0 %v307
        %v309 = vpop.xlane.xlu0 %308
        %v310 = vsel %vm252, %v296, 0.0
        %311 = vadd.xlane.f32.xlu0 %v310
        %v312 = vpop.xlane.xlu0 %311
        %v313 = vsel %vm252, %v297, 0.0
        %314 = vadd.xlane.f32.xlu0 %v313
        %v315 = vpop.xlane.xlu0 %314
        %v316 = vsel %vm252, %v298, 0.0
        %317 = vadd.xlane.f32.xlu0 %v316
        %v318 = vpop.xlane.xlu0 %317
        %v319 = vsel %vm252, %v299, 0.0
        %320 = vadd.xlane.f32.xlu0 %v319
        %v321 = vpop.xlane.xlu0 %320
        %v322 = vsel %vm252, %v300, 0.0
        %323 = vadd.xlane.f32.xlu0 %v322
        %v324 = vpop.xlane.xlu0 %323
        %v325 = vadd.f32 %v303, %v309
        %v326 = vadd.f32 %v325, %v315
        %v327 = vadd.f32 %v326, %v321
        %v328 = vadd.f32 %v306, %v312
        %v329 = vadd.f32 %v328, %v318
        %v330 = vadd.f32 %v329, %v324
        %v331 = vmul.f32 %v327, 0.015625
        %v332 = vmul.f32 %v330, 0.015625
        %v333 = vadd.f32 %v331, 1e-05
        %v334 = vadd.f32 %v332, 1e-05
        %v335 = vrsqrt.pop %v333
        %v336 = vmul.f32 %v335, %v333
        %v337 = vmul.f32 %v336, %v335
        %v338 = vmul.f32 0.5, %v337
        %v339 = vsub.f32 1.5, %v338
        %v340 = vmul.f32 %v335, %v339
        %vm341 = vweird.f32 %v333
        %vm342 = vweird.f32 %v335
        %vm343 = vmor %vm341, %vm342
        %v344 = vsel %vm343, %v335, %v340
        %v345 = vrsqrt.pop %v334
        %v346 = vmul.f32 %v345, %v334
        %v347 = vmul.f32 %v346, %v345
        %v348 = vmul.f32 0.5, %v347
        %v349 = vsub.f32 1.5, %v348
        %v350 = vmul.f32 %v345, %v349
        %vm351 = vweird.f32 %v334
        %vm352 = vweird.f32 %v345
        %vm353 = vmor %vm351, %vm352
        %v354 = vsel %vm353, %v345, %v350
        %v355 = vld [vmem:[#allocation5] sm:$0x1]
        %v356 = vld [vmem:[#allocation5 + $0x1] sm:$0x1]
        %v357 = vld [vmem:[#allocation5 + $0x2] sm:$0x1]
        %v358 = vld [vmem:[#allocation5 + $0x3] sm:$0x1]
        %v359 = vld [vmem:[#allocation7] sm:$0x1]
        %v360 = vld [vmem:[#allocation7 + $0x1] sm:$0x1]
        %v361 = vld [vmem:[#allocation7 + $0x2] sm:$0x1]
        %v362 = vld [vmem:[#allocation7 + $0x3] sm:$0x1]
        %v363 = vmul.f32 %v285, %v344
        %v364 = vmul.f32 %v286, %v354
        %v365 = vmul.f32 %v287, %v344
        %v366 = vmul.f32 %v288, %v354
        %v367 = vmul.f32 %v289, %v344
        %v368 = vmul.f32 %v290, %v354
        %v369 = vmul.f32 %v291, %v344
        %v370 = vmul.f32 %v292, %v354
        %v375 = vperm.slane %v355, 0
        %v376 = vperm.slane %v356, 0
        %v377 = vperm.slane %v357, 0
        %v378 = vperm.slane %v358, 0
        %v383 = vmul.f32 %v363, %v375
        %v384 = vmul.f32 %v364, %v375
        %v385 = vmul.f32 %v365, %v376
        %v386 = vmul.f32 %v366, %v376
        %v387 = vmul.f32 %v367, %v377
        %v388 = vmul.f32 %v368, %v377
        %v389 = vmul.f32 %v369, %v378
        %v390 = vmul.f32 %v370, %v378
        %v395 = vperm.slane %v359, 0
        %v396 = vperm.slane %v360, 0
        %v397 = vperm.slane %v361, 0
        %v398 = vperm.slane %v362, 0
        %v403 = vadd.f32 %v383, %v395
        %v404 = vadd.f32 %v384, %v395
        %v405 = vadd.f32 %v385, %v396
        %v406 = vadd.f32 %v386, %v396
        %v407 = vadd.f32 %v387, %v397
        %v408 = vadd.f32 %v388, %v397
        %v409 = vadd.f32 %v389, %v398
        %v410 = vadd.f32 %v390, %v398
        %411 = vst.msk [vmem:[%s241] sm:$0xff] %vm252, %v403
        %412 = vst.msk [vmem:[%s241 + $0x8] sm:$0xff] %vm252, %v404
        %413 = vst.msk [vmem:[%s241 + $0x10] sm:$0xff] %vm252, %v405
        %414 = vst.msk [vmem:[%s241 + $0x18] sm:$0xff] %vm252, %v406
        %415 = vst.msk [vmem:[%s241 + $0x20] sm:$0xff] %vm252, %v407
        %416 = vst.msk [vmem:[%s241 + $0x28] sm:$0xff] %vm252, %v408
        %417 = vst.msk [vmem:[%s241 + $0x30] sm:$0xff] %vm252, %v409
        %418 = vst.msk [vmem:[%s241 + $0x38] sm:$0xff] %vm252, %v410
        %s419 = sand.u32 %s113, 1
        %s420 = scalar_lea.sflag [#allocation4], %s419
        %s421 = sand.u32 %s113, 1
        %s422 = smul.addr %s421, 64
        %s423 = scalar_lea.vmem [#allocation8], %s422
        // Predicated region
        $region45: #{tpu_custom_call.1} parent=31 // pred_check
          %p424 = pneg %p123
        $region46: #{tpu_custom_call.1} parent=31 // pred_check_branch
          %426 = sbr.rel (%p424) target = $region48
        $region47: #{tpu_custom_call.1} parent=31 // pred_region
          %s427 = smul.u32 2, %s26
          %429 = vsyncadd %s420, 0
          %s430 = smul.addr %s25, 8
          %s431 = sadd.s32 %s427, %s430
          %s432 = smul.addr %s431, 8
          %s433 = scalar_lea.hbm %s3, %s432
          %s434 = sshll.u32 %s423, 4
          %s435 = int_to_ptr.vmem [resolvable:$true] %s434
          %s436 = sshll.u32 %s433, 4
          %s437 = int_to_ptr.hbm [resolvable:$true] %s436
          %442 = dma.vmem_to_hbm [thread:$0]  %s435, 1024, %s437, %s420, 128, 128, 8
        $region48: #{tpu_custom_call.1} parent=31 // pred_fallthru
          _
      $region32: #{tpu_custom_call.1} parent=5 // pred_fallthru
        _
      %p443 = scmp.le.s32.totalorder 2, %s16
      // Predicated region
      $region49: #{tpu_custom_call.1} parent=5 // pred_check
        %p444 = pneg %p443
      $region50: #{tpu_custom_call.1} parent=5 // pred_check_branch
        %446 = sbr.rel (%p444) target = $region52
      $region51: #{tpu_custom_call.1} parent=5 // pred_region
        %s447 = ssub.s32 %s16, 2
        // Predicated region
        $region53: #{tpu_custom_call.1} parent=51 // pred_check
          %p448 = pneg %p129
        $region54: #{tpu_custom_call.1} parent=51 // pred_check_branch
          %450 = sbr.rel (%p448) target = $region56
        $region55: #{tpu_custom_call.1} parent=51 // pred_region
          %s451 = sand.u32 %s114, 1
          %s452 = scalar_lea.sflag [#allocation4], %s451
          %s453 = sand.u32 %s114, 1
          %s454 = smul.addr %s453, 64
          %s455 = scalar_lea.vmem [#allocation8], %s454
          %457 = dma.done %s452, 1024
        $region56: #{tpu_custom_call.1} parent=51 // pred_fallthru
          _
      $region52: #{tpu_custom_call.1} parent=5 // pred_fallthru
        _
    $region6: #{tpu_custom_call.1} parent=1 // loop_footer
      %s20 = sadd.s32 1, %s16
    $region7: #{tpu_custom_call.1} parent=1 // loop_footer_branch
      %15 = sbr.rel target = $region3
    $region8: #{tpu_custom_call.1} parent=1 // loop_exit
      _
    %458 = vsyncpa [#allocation3], 1
    %s459 = scalar_lea.sflag [#allocation3], 1
    %460 = vsyncpa %s459, 1
    %461 = vsyncpa [#allocation6], 1
    %462 = vsyncpa [#allocation4], 1
    %s463 = scalar_lea.sflag [#allocation4], 1
    %464 = vsyncpa %s463, 1

</llo_original>
